<compile_context>
chip_gen: v6e
topology: v6e:2x2x1
jax: 0.10.0
libtpu: 0.0.40
codegen_flags: <defaults>
</compile_context>

<pallas_src>
import jax
import jax.numpy as jnp
from jax.experimental import pallas as pl
from jax.experimental.pallas import tpu as pltpu

_LANE = 128
_MIN_GRID_STEPS = 4            # >= 2 steps per TensorCore on v7x + keeps pipelining
_DMA_PATH_STATE = "untried"    # "untried" | "ok" | "bad"


def _round_up(x: int, m: int) -> int:
    return ((x + m - 1) // m) * m


def _sublane_multiple(dtype) -> int:
    # Sub-32-bit dtypes pack along sublanes: 8 rows (4B), 16 (2B), 32 (1B).
    itemsize = jnp.dtype(dtype).itemsize
    return 8 * max(1, 4 // itemsize)


def _vmem_budget_bytes() -> int:
    """Scoped-VMEM budget we are willing to request (conservative across gens)."""
    cap = None
    try:
        info = pltpu.get_tpu_info()
        cap = getattr(info, "vmem_capacity_bytes", None) or getattr(
            info, "vmem_size_bytes", None)
    except Exception:
        cap = None
    if not cap:
        cap = 64 << 20             # most restrictive generation (v7x: 64 MiB / TC)
    return min(48 << 20, int(cap) * 3 // 4)


# ----------------------------------------------------------------------------
# VMEM (BlockSpec auto-pipelined) path kernels.
# ----------------------------------------------------------------------------
def _copy_kernel(x_ref, o_ref):
    # Input block was already chomped by the input BlockSpec: straight copy.
    o_ref[...] = x_ref[...]


def _slice_kernel(x_ref, o_ref):
    # Input block carries the full width; chomp in VMEM.
    o_ref[...] = x_ref[:, : o_ref.shape[-1]]


def _chomp_vmem(x2: jax.Array, w_out: int, chomp_size: int,
                target_block_bytes: int) -> jax.Array:
    R, W = x2.shape
    dtype = x2.dtype
    itemsize = jnp.dtype(dtype).itemsize
    sub = _sublane_multiple(dtype)

    # Fold the chomp into the input BlockSpec only when it is both legal
    # (W_out lane-aligned) and worthwhile (long row segments, or a large
    # chomp fraction worth the strided input DMA).  Otherwise load the full
    # width contiguously and slice in VMEM.
    lane_aligned = (w_out % _LANE == 0)
    chomp_in_blockspec = lane_aligned and (
        w_out * itemsize >= 2048 or chomp_size * 4 >= W)
    w_in_block = w_out if chomp_in_blockspec else W
    kernel = _copy_kernel if chomp_in_blockspec else _slice_kernel

    # --- VMEM accounting with 128-lane padding of the minor dim. -------------
    w_in_pad = _round_up(w_in_block, _LANE)
    w_out_pad = _round_up(w_out, _LANE)
    pair_row_bytes = (w_in_pad + w_out_pad) * itemsize   # padded in+out per row

    budget = _vmem_budget_bytes()
    rows_from_target = max(1, target_block_bytes // (w_in_pad * itemsize))
    rows_from_vmem = max(1, (budget - (2 << 20)) // (2 * pair_row_bytes))
    tile_r = max(sub, (min(rows_from_target, rows_from_vmem) // sub) * sub)

    if R <= sub:
        tile_r = R                      # block dim == full array dim (legal)
    else:
        if R >= 2 * _MIN_GRID_STEPS * sub:
            # Guarantee >= _MIN_GRID_STEPS grid steps so the "parallel" axis
            # splits across v7x's 2 TCs and DMA/compute overlap is preserved.
            cap = max(sub, (pl.cdiv(R, _MIN_GRID_STEPS) // sub) * sub)
            tile_r = min(tile_r, cap)
        tile_r = min(tile_r, _round_up(R, sub))

    grid = (pl.cdiv(R, tile_r),)

    # Explicit scoped-VMEM bound: double-buffered padded (input + output)
    # blocks plus slack, capped well below v7x's 64 MiB physical VMEM.
    block_bytes = 2 * tile_r * pair_row_bytes
    vmem_limit = int(min(56 << 20, max(16 << 20, block_bytes + (4 << 20))))

    return pl.pallas_call(
        kernel,
        out_shape=jax.ShapeDtypeStruct((R, w_out), dtype),
        grid_spec=pltpu.PrefetchScalarGridSpec(
            num_scalar_prefetch=0,
            grid=grid,
            in_specs=[pl.BlockSpec((tile_r, w_in_block), lambda i: (i, 0))],
            out_specs=pl.BlockSpec((tile_r, w_out), lambda i: (i, 0)),
        ),
        compiler_params=pltpu.CompilerParams(
            dimension_semantics=("parallel",),
            vmem_limit_bytes=vmem_limit,
        ),
        cost_estimate=pl.CostEstimate(
            flops=0, transcendentals=0,
            bytes_accessed=R * (w_in_block + w_out) * itemsize),
    )(x2)


# ----------------------------------------------------------------------------
# HBM -> HBM strided-DMA path (lane-sparse widths, W_out < 128).
# ----------------------------------------------------------------------------
def _chomp_dma(x2: jax.Array, w_out: int) -> jax.Array:
    R, W = x2.shape
    itemsize = jnp.dtype(x2.dtype).itemsize
    n_bytes = R * w_out * itemsize

    # Up to 8 concurrent DMAs over disjoint row ranges (static chunking).
    num_dmas = int(max(1, min(8, R // 512)))
    base, rem = divmod(R, num_dmas)
    chunks, r0 = [], 0
    for i in range(num_dmas):
        rows = base + (1 if i < rem else 0)
        chunks.append((r0, rows))
        r0 += rows

    def kernel(x_ref, o_ref, sems):
        # Issue all strided HBM->HBM copies, then wait for all of them.
        for i, (start, rows) in enumerate(chunks):
            pltpu.make_async_copy(
                x_ref.at[pl.ds(start, rows), pl.ds(0, w_out)],
                o_ref.at[pl.ds(start, rows), pl.ds(0, w_out)],
                sems.at[i],
            ).start()
        for i, (start, rows) in enumerate(chunks):
            pltpu.make_async_copy(
                x_ref.at[pl.ds(start, rows), pl.ds(0, w_out)],
                o_ref.at[pl.ds(start, rows), pl.ds(0, w_out)],
                sems.at[i],
            ).wait()

    return pl.pallas_call(
        kernel,
        out_shape=jax.ShapeDtypeStruct((R, w_out), x2.dtype),
        in_specs=[pl.BlockSpec(memory_space=pl.ANY)],
        out_specs=pl.BlockSpec(memory_space=pl.ANY),
        scratch_shapes=[pltpu.SemaphoreType.DMA((num_dmas,))],
        cost_estimate=pl.CostEstimate(
            flops=0, transcendentals=0, bytes_accessed=2 * n_bytes),
    )(x2)


# ----------------------------------------------------------------------------
# Public wrapper.
# ----------------------------------------------------------------------------
def chomp2d(x: jax.Array, chomp_size: int,
            *, target_block_bytes: int = 8 * 1024 * 1024) -> jax.Array:
    """Pallas equivalent of PyTorch Chomp2d: x[:, :, :, :-chomp_size]."""
    global _DMA_PATH_STATE
    assert chomp_size > 0, "chomp_size must be positive (matches x[..., :-cs])"
    N, C, H, W = x.shape
    W_out = W - chomp_size
    assert W_out > 0, "chomp_size must be smaller than the width dimension"

    # The chomp only touches the last axis -> free, layout-preserving collapse.
    R = N * C * H
    x2 = x.reshape(R, W)

    if W_out < _LANE and _DMA_PATH_STATE != "bad":
        # Lane-sparse output: masked vector stores would waste >90% of the
        # vst slot; go straight HBM->HBM via the DMA engines instead.
        try:
            out2 = _chomp_dma(x2, W_out)
            if _DMA_PATH_STATE == "untried":
                jax.block_until_ready(out2)   # verify once, then trust it
                _DMA_PATH_STATE = "ok"
            return out2.reshape(N, C, H, W_out)
        except Exception:
            # Toolchain rejected the strided HBM->HBM DMA: fall back to the
            # (slower but always-legal) VMEM copy path from here on.
            _DMA_PATH_STATE = "bad"

    out2 = _chomp_vmem(x2, W_out, chomp_size, target_block_bytes)
    return out2.reshape(N, C, H, W_out)


if __name__ == "__main__":
    key = jax.random.PRNGKey(0)
    k1, k2, k3, k4 = jax.random.split(key, 4)

    # Case 1: typical TCN-style shape, W_out=13 < 128  -> HBM->HBM DMA path.
    x1 = jax.random.normal(k1, (2, 4, 16, 16), dtype=jnp.float32)
    cs1 = 3
    out1 = jax.block_until_ready(chomp2d(x1, cs1))
    ref1 = x1[:, :, :, :-cs1]
    assert out1.shape == ref1.shape and out1.dtype == x1.dtype
    assert jnp.array_equal(out1, ref1), "case 1 mismatch vs reference slice"

    # Case 2: W_out=128 (lane-aligned but short rows) -> VMEM full-W load + slice.
    x2 = jax.random.normal(k2, (1, 2, 8, 131), dtype=jnp.float32)
    cs2 = 3
    out2 = jax.block_until_ready(chomp2d(x2, cs2))
    ref2 = x2[:, :, :, :-cs2]
    assert out2.shape == ref2.shape and out2.dtype == x2.dtype
    assert jnp.array_equal(out2, ref2), "case 2 mismatch vs reference slice"

    # Case 3: bf16, W_out=11 < 128 -> DMA path with a 2-byte dtype.
    x3 = jax.random.normal(k3, (2, 4, 16, 16), dtype=jnp.bfloat16)
    cs3 = 5
    out3 = jax.block_until_ready(chomp2d(x3, cs3))
    ref3 = x3[:, :, :, :-cs3]
    assert out3.shape == ref3.shape and out3.dtype == x3.dtype
    assert jnp.array_equal(out3, ref3), "case 3 mismatch vs reference slice"

    # Case 4: W_out=512 (aligned, long rows) -> chomp folded into the input
    # BlockSpec, multi-step "parallel" grid.
    x4 = jax.random.normal(k4, (2, 3, 32, 515), dtype=jnp.float32)
    cs4 = 3
    out4 = jax.block_until_ready(chomp2d(x4, cs4))
    ref4 = x4[:, :, :, :-cs4]
    assert out4.shape == ref4.shape and out4.dtype == x4.dtype
    assert jnp.array_equal(out4, ref4), "case 4 mismatch vs reference slice"

    print("KERNEL_OK")
</pallas_src>

<mosaic_0001>
module attributes {stable_mosaic.version = 11 : i64} {
  func.func @kernel(%arg0: memref<128x16xf32, #tpu.memory_space<any>>, %arg1: memref<128x13xf32, #tpu.memory_space<any>>, %arg2: memref<1x!tpu.dma_semaphore, #tpu.memory_space<semaphore_mem>>) attributes {dimension_semantics = [], scalar_prefetch = 0 : i64, scratch_operands = 1 : i64, tpu.core_type = #tpu.core_type<tc>} {
    %c0_i32 = arith.constant 0 : i32
    %c0_i32_0 = arith.constant 0 : i32
    %c0_i32_1 = arith.constant 0 : i32
    %0 = tpu.memref_slice %arg0[%c0_i32_0, %c0_i32_1] : memref<128x16xf32, #tpu.memory_space<any>> -> memref<128x13xf32, #tpu.memory_space<any>>
    %c0_i32_2 = arith.constant 0 : i32
    %c0_i32_3 = arith.constant 0 : i32
    %1 = tpu.memref_slice %arg1[%c0_i32_2, %c0_i32_3] : memref<128x13xf32, #tpu.memory_space<any>> -> memref<128x13xf32, #tpu.memory_space<any>>
    %2 = tpu.memref_slice %arg2[%c0_i32] : memref<1x!tpu.dma_semaphore, #tpu.memory_space<semaphore_mem>> -> memref<1x!tpu.dma_semaphore, #tpu.memory_space<semaphore_mem>>
    %3 = tpu.memref_squeeze %2 : memref<1x!tpu.dma_semaphore, #tpu.memory_space<semaphore_mem>> -> memref<!tpu.dma_semaphore, #tpu.memory_space<semaphore_mem>>
    tpu.enqueue_dma source(%0 : memref<128x13xf32, #tpu.memory_space<any>>) target(%1 : memref<128x13xf32, #tpu.memory_space<any>>) target_semaphore(%3 : memref<!tpu.dma_semaphore, #tpu.memory_space<semaphore_mem>>)
    %c0_i32_4 = arith.constant 0 : i32
    %c0_i32_5 = arith.constant 0 : i32
    %c0_i32_6 = arith.constant 0 : i32
    %4 = tpu.memref_slice %arg0[%c0_i32_5, %c0_i32_6] : memref<128x16xf32, #tpu.memory_space<any>> -> memref<128x13xf32, #tpu.memory_space<any>>
    %c0_i32_7 = arith.constant 0 : i32
    %c0_i32_8 = arith.constant 0 : i32
    %5 = tpu.memref_slice %arg1[%c0_i32_7, %c0_i32_8] : memref<128x13xf32, #tpu.memory_space<any>> -> memref<128x13xf32, #tpu.memory_space<any>>
    %6 = tpu.memref_slice %arg2[%c0_i32_4] : memref<1x!tpu.dma_semaphore, #tpu.memory_space<semaphore_mem>> -> memref<1x!tpu.dma_semaphore, #tpu.memory_space<semaphore_mem>>
    %7 = tpu.memref_squeeze %6 : memref<1x!tpu.dma_semaphore, #tpu.memory_space<semaphore_mem>> -> memref<!tpu.dma_semaphore, #tpu.memory_space<semaphore_mem>>
    tpu.wait_dma2 semaphore(%7 : memref<!tpu.dma_semaphore, #tpu.memory_space<semaphore_mem>>) src(%4 : memref<128x13xf32, #tpu.memory_space<any>>) dst(%5 : memref<128x13xf32, #tpu.memory_space<any>>)
    return
  }
}

module attributes {stable_mosaic.version = 11 : i64} {
  func.func @_slice_kernel(%arg0: i32, %arg1: memref<32x16xf32, #tpu.memory_space<vmem>>, %arg2: memref<32x13xf32, #tpu.memory_space<vmem>>) attributes {dimension_semantics = [#tpu.dimension_semantics<parallel>], iteration_bounds = array<i64: 4>, scalar_prefetch = 0 : i64, scratch_operands = 0 : i64, tpu.core_type = #tpu.core_type<tc>, window_params = [{transform_indices = @transform_0, window_bounds = array<i64: 32, 16>}, {transform_indices = @transform_1, window_bounds = array<i64: 32, 13>}]} {
    %c0 = arith.constant 0 : index
    %c0_0 = arith.constant 0 : index
    %0 = vector.load %arg1[%c0, %c0_0] : memref<32x16xf32, #tpu.memory_space<vmem>>, vector<32x13xf32>
    %c0_1 = arith.constant 0 : index
    %c0_2 = arith.constant 0 : index
    %1 = vector.load %arg2[%c0_1, %c0_2] : memref<32x13xf32, #tpu.memory_space<vmem>>, vector<32x13xf32>
    tpu.vector_store %arg2[%c0_1, %c0_2], %0 {strides = array<i32>} : memref<32x13xf32, #tpu.memory_space<vmem>>, vector<32x13xf32>,
    return
  }
  func.func @transform_0(%arg0: i32) -> (i32, i32) {
    %c0_i32 = arith.constant 0 : i32
    %c0_i32_0 = arith.constant 0 : i32
    return %arg0, %c0_i32 : i32, i32
  }
  func.func @transform_1(%arg0: i32) -> (i32, i32) {
    %c0_i32 = arith.constant 0 : i32
    %c0_i32_0 = arith.constant 0 : i32
    return %arg0, %c0_i32 : i32, i32
  }
}

</mosaic_0001>

<llo_original>
// kernel: tpu_custom_call.1
$region0: #{tpu_custom_call.1}
  #allocation0 [shape = 'u32[]', space=smem, size = 0x4, offset = 0x4, fixed_abs, tag = 'smem constant byte address 0x4 - core index']
  #allocation1 [shape = 'u32[144,128]{1,0:T(1,128)}', space=vmem, size = 0x12000, scoped, tag = 'internal scratch']
  %s0 = inlined_call_operand.vmem [shape: f32[128,16], index: 0, kind: input, shape index: {}]
  %s1 = inlined_call_operand.vmem [shape: f32[128,13], index: 1, kind: output, shape index: {}]
  %s2 = sld [smem:[#allocation0]]
  $region37: #{tpu_custom_call.1} parent=0
    _
  %s4 = ssub.s32 1, %s2
  %s5 = scalar_select 0, %s4, %s2
  loop: start=0, step=1, limit=6
  $region2: #{tpu_custom_call.1} parent=0 // loop_pre_header
    _
  $region3: #{tpu_custom_call.1} parent=0 // loop_header
    %s7 = sphi 0, %s11
    %p8 = scmp.ge.s32.totalorder %s7, 6
    %s17 = sphi 0, %s19
    %s20 = sphi 0, %s17
    %s21 = sphi 0, %s20
    %s37 = sphi 0, %s21
    %s43 = sphi 0, %s45
    %s46 = sphi 0, %s43
    %s47 = sphi 0, %s46
    %s63 = sphi 0, %s47
  $region4: #{tpu_custom_call.1} parent=0 // loop_header_branch
    %10 = sbr.rel (%p8) target = $region8
  $region5: #{tpu_custom_call.1} parent=0 // loop_body
    %s12 = ssub.s32 %s7, 1
    %s13 = ssub.s32 %s7, 2
    %s14 = sadd.s32 %s7, 1
    %s15 = ssub.s32 %s7, %s14
    %p16 = scmp.eq.s32.totalorder %s15, 0
    %s18 = sadd.s32 %s17, 1
    %s19 = scalar_select %p16, %s17, %s18
    %p22 = pneg %p16
    %p23 = scmp.eq.s32.totalorder %s7, 3
    %p24 = por %p22, %p23
    %p25 = scmp.ne.s32.totalorder %s17, %s20
    %p26 = scmp.eq.s32.totalorder %s7, 0
    %p27 = por %p25, %p26
    %p28 = scmp.ne.s32.totalorder %s17, %s20
    %p29 = scmp.eq.s32.totalorder %s12, 3
    %p30 = por %p28, %p29
    %p31 = scmp.ne.s32.totalorder %s20, %s21
    %p32 = scmp.eq.s32.totalorder %s12, 0
    %p33 = por %p31, %p32
    %p34 = scmp.ne.s32.totalorder %s20, %s21
    %p35 = scmp.eq.s32.totalorder %s13, 3
    %p36 = por %p34, %p35
    %p38 = scmp.ne.s32.totalorder %s21, %s37
    %p39 = scmp.eq.s32.totalorder %s13, 0
    %p40 = por %p38, %p39
    %s41 = ssub.s32 %s7, %s14
    %p42 = scmp.eq.s32.totalorder %s41, 0
    %s44 = sadd.s32 %s43, 1
    %s45 = scalar_select %p42, %s43, %s44
    %p48 = pneg %p42
    %p49 = scmp.eq.s32.totalorder %s7, 3
    %p50 = por %p48, %p49
    %p51 = scmp.ne.s32.totalorder %s43, %s46
    %p52 = scmp.eq.s32.totalorder %s7, 0
    %p53 = por %p51, %p52
    %p54 = scmp.ne.s32.totalorder %s43, %s46
    %p55 = scmp.eq.s32.totalorder %s12, 3
    %p56 = por %p54, %p55
    %p57 = scmp.ne.s32.totalorder %s46, %s47
    %p58 = scmp.eq.s32.totalorder %s12, 0
    %p59 = por %p57, %p58
    %p60 = scmp.ne.s32.totalorder %s46, %s47
    %p61 = scmp.eq.s32.totalorder %s13, 3
    %p62 = por %p60, %p61
    %p64 = scmp.ne.s32.totalorder %s47, %s63
    %p65 = scmp.eq.s32.totalorder %s13, 0
    %p66 = por %p64, %p65
    %p67 = scmp.le.s32.totalorder 1, %s7
    %p68 = scmp.lt.s32.totalorder %s7, 5
    %p69 = pnand %p67, %p68
    %p70 = pneg %p69
    // Predicated region
    $region9: #{tpu_custom_call.1} parent=5 // pred_check
      _
    $region10: #{tpu_custom_call.1} parent=5 // pred_check_branch
      %72 = sbr.rel (%p69) target = $region12
    $region11: #{tpu_custom_call.1} parent=5 // pred_region
      %s73 = ssub.s32 %s7, 1
    $region12: #{tpu_custom_call.1} parent=5 // pred_fallthru
      _
    %p74 = scmp.lt.s32.totalorder %s7, 4
    // Predicated region
    $region13: #{tpu_custom_call.1} parent=5 // pred_check
      %p75 = pneg %p74
    $region14: #{tpu_custom_call.1} parent=5 // pred_check_branch
      %77 = sbr.rel (%p75) target = $region16
    $region15: #{tpu_custom_call.1} parent=5 // pred_region
      // Predicated region
      $region17: #{tpu_custom_call.1} parent=15 // pred_check
        %p78 = pneg %p27
      $region18: #{tpu_custom_call.1} parent=15 // pred_check_branch
        %80 = sbr.rel (%p78) target = $region20
      $region19: #{tpu_custom_call.1} parent=15 // pred_region
        %s81 = smul.u32 4, %s7
        %p82 = scmp.lt.s32.totalorder %s81, 15
        %s83 = scalar_select %p82, %s81, 15
        %s84 = smul.addr %s83, 8
        %s85 = scalar_lea.vmem %s0, %s84
        %s86 = smul.u32 4, %s7
      $region20: #{tpu_custom_call.1} parent=15 // pred_fallthru
        _
    $region16: #{tpu_custom_call.1} parent=5 // pred_fallthru
      _
    %p87 = scmp.le.s32.totalorder 1, %s7
    %p88 = scmp.lt.s32.totalorder %s7, 5
    %p89 = pnand %p87, %p88
    %p90 = pneg %p89
    // Predicated region
    $region21: #{tpu_custom_call.1} parent=5 // pred_check
      _
    $region22: #{tpu_custom_call.1} parent=5 // pred_check_branch
      %92 = sbr.rel (%p89) target = $region24
    $region23: #{tpu_custom_call.1} parent=5 // pred_region
      %s93 = ssub.s32 %s7, 1
      %s94 = smul.u32 4, %s12
      %p95 = scmp.lt.s32.totalorder %s94, 15
      %s96 = scalar_select %p95, %s94, 15
      %s97 = smul.addr %s96, 8
      %s98 = scalar_lea.vmem %s0, %s97
      %p99 = pneg %p33
      %p100 = pneg %p30
      %p101 = pneg %p59
      %p102 = pneg %p56
      %s103 = smul.u32 4, %s12
      %p104 = scmp.lt.s32.totalorder %s103, 15
      %s105 = scalar_select %p104, %s103, 15
      %s106 = smul.addr %s105, 8
      %s107 = scalar_lea.vmem %s1, %s106
      %s108 = smul.u32 4, %s12
      %p109 = scmp.lt.s32.totalorder %s108, 15
      %s110 = scalar_select %p109, %s108, 15
      %s111 = smul.addr %s110, 8
      %s112 = scalar_lea.vmem %s0, %s111
      %s113 = smul.u32 4, %s12
      %s114 = smul.u32 4, %s12
      %p115 = scmp.lt.s32.totalorder %s114, 15
      %s116 = scalar_select %p115, %s114, 15
      %s117 = smul.addr %s116, 8
      %s118 = scalar_lea.vmem %s1, %s117
      %s119 = smul.u32 4, %s12
      %v120 = vld [vmem:[%s112] sm:$0xff]
      %v121 = vld [vmem:[%s112 + $0x8] sm:$0xff]
      %v122 = vld [vmem:[%s112 + $0x10] sm:$0xff]
      %v123 = vld [vmem:[%s112 + $0x18] sm:$0xff]
      %vm124 = vcmask 105472
      %125 = vst.msk [vmem:[%s118] sm:$0xff] %vm124, %v120
      %126 = vst.msk [vmem:[%s118 + $0x8] sm:$0xff] %vm124, %v121
      %127 = vst.msk [vmem:[%s118 + $0x10] sm:$0xff] %vm124, %v122
      %128 = vst.msk [vmem:[%s118 + $0x18] sm:$0xff] %vm124, %v123
      %s129 = smul.u32 4, %s12
      %p130 = scmp.lt.s32.totalorder %s129, 15
      %s131 = scalar_select %p130, %s129, 15
      %s132 = smul.addr %s131, 8
      %s133 = scalar_lea.vmem %s1, %s132
      // Predicated region
      $region25: #{tpu_custom_call.1} parent=23 // pred_check
        %p134 = pneg %p56
      $region26: #{tpu_custom_call.1} parent=23 // pred_check_branch
        %136 = sbr.rel (%p134) target = $region28
      $region27: #{tpu_custom_call.1} parent=23 // pred_region
        %s137 = smul.u32 4, %s12
      $region28: #{tpu_custom_call.1} parent=23 // pred_fallthru
        _
    $region24: #{tpu_custom_call.1} parent=5 // pred_fallthru
      _
    %p138 = scmp.le.s32.totalorder 2, %s7
    // Predicated region
    $region29: #{tpu_custom_call.1} parent=5 // pred_check
      %p139 = pneg %p138
    $region30: #{tpu_custom_call.1} parent=5 // pred_check_branch
      %141 = sbr.rel (%p139) target = $region32
    $region31: #{tpu_custom_call.1} parent=5 // pred_region
      %s142 = ssub.s32 %s7, 2
      // Predicated region
      $region33: #{tpu_custom_call.1} parent=31 // pred_check
        %p143 = pneg %p62
      $region34: #{tpu_custom_call.1} parent=31 // pred_check_branch
        %145 = sbr.rel (%p143) target = $region36
      $region35: #{tpu_custom_call.1} parent=31 // pred_region
        %s146 = smul.u32 4, %s13
        %p147 = scmp.lt.s32.totalorder %s146, 15
        %s148 = scalar_select %p147, %s146, 15
        %s149 = smul.addr %s148, 8
        %s150 = scalar_lea.vmem %s1, %s149
      $region36: #{tpu_custom_call.1} parent=31 // pred_fallthru
        _
    $region32: #{tpu_custom_call.1} parent=5 // pred_fallthru
      _
  $region6: #{tpu_custom_call.1} parent=0 // loop_footer
    %s11 = sadd.s32 1, %s7
  $region7: #{tpu_custom_call.1} parent=0 // loop_footer_branch
    %6 = sbr.rel target = $region3
  $region8: #{tpu_custom_call.1} parent=0 // loop_exit
    _

</llo_original>
